<compile_context>
chip_gen: v5e
topology: v5e:2x2
jax: 0.10.0
libtpu: 0.0.40
codegen_flags: <defaults>
</compile_context>

<pallas_src>
import jax
import jax.numpy as jnp
from jax import lax
from jax.experimental import pallas as pl
from jax.experimental.pallas import tpu as pltpu

# ----------------------------- config (cfg.*) --------------------------------
POSITIVE_RADIUS = 0.05   # cfg.fine_loss.positive_radius


# ------------------------------- Pallas kernel --------------------------------
def _fine_matching_kernel(tform_ref, ref_ref, src_ref, scores_ref, out_ref):
    # tform_ref  : (12,) f32 SMEM   -- row-major [R|t] (3x4)
    # ref_ref    : (B, K1, 4) f32   -- lanes 0..2 = ref coords, lane 3 = ref mask
    # src_ref    : (B, 4, K1) f32   -- sublanes 0..2 = raw src coords, sublane 3 = mask
    # scores_ref : (B, K1, K1) f32  -- full matching_scores (incl. slack row/col)
    # out_ref    : (1, 1) f32 SMEM scalar
    B, K1, _ = ref_ref.shape
    f32 = jnp.float32

    # Raw (untransformed) src coordinates + masks, native layouts (no relayout).
    sx = src_ref[:, 0:1, :]                               # (B, 1, K1)
    sy = src_ref[:, 1:2, :]
    sz = src_ref[:, 2:3, :]
    src_m = src_ref[:, 3:4, :]                            # (B, 1, K1)
    ref_m = ref_ref[:, :, 3:4]                            # (B, K1, 1)

    # Squared pairwise distances with the rigid transform fused in, unrolled
    # over the 3 output coordinates (pure VPU, no MXU).
    dists = None
    for d in range(3):
        s_d = (tform_ref[4 * d + 0] * sx
               + tform_ref[4 * d + 1] * sy
               + tform_ref[4 * d + 2] * sz
               + tform_ref[4 * d + 3])                    # (B, 1, K1)
        r_d = ref_ref[:, :, d:d + 1]                      # (B, K1, 1)
        diff = r_d - s_d                                  # (B, K1, K1)
        sq = diff * diff
        dists = sq if dists is None else dists + sq

    # Ground-truth correspondence map (padded row/col are masked out already).
    gt_mask = (ref_m > 0.0) & (src_m > 0.0)               # (B, K1, K1)
    gt = ((dists < POSITIVE_RADIUS ** 2) & gt_mask).astype(f32)

    # Slack labels (counts are sums of 0/1 floats, so == 0.0 is exact).
    row_cnt = jnp.sum(gt, axis=2, keepdims=True)          # (B, K1, 1)
    col_cnt = jnp.sum(gt, axis=1, keepdims=True)          # (B, 1, K1)
    slack_row = ((row_cnt == 0.0) & (ref_m > 0.0)).astype(f32)   # (B, K1, 1)
    slack_col = ((col_cnt == 0.0) & (src_m > 0.0)).astype(f32)   # (B, 1, K1)

    # Full-size label tensor: gt in the main block, slack row in lane K,
    # slack col in sublane K (corner stays 0 because padded masks are 0).
    lane_idx = lax.broadcasted_iota(jnp.int32, (B, K1, K1), 2)
    sub_idx = lax.broadcasted_iota(jnp.int32, (B, K1, K1), 1)
    labels = (gt
              + slack_row * (lane_idx == K1 - 1).astype(f32)
              + slack_col * (sub_idx == K1 - 1).astype(f32))

    # loss = -matching_scores[labels].mean()
    num = jnp.sum(scores_ref[...] * labels)
    den = jnp.sum(labels)
    out_ref[0, 0] = -(num / den)


# --------------------------------- wrapper ------------------------------------
def fine_matching_loss(output_dict, data_dict):
    ref_pts = output_dict['ref_node_corr_knn_points'].astype(jnp.float32)   # (B, K, 3)
    src_pts = output_dict['src_node_corr_knn_points'].astype(jnp.float32)   # (B, K, 3)
    ref_masks = output_dict['ref_node_corr_knn_masks'].astype(jnp.float32)  # (B, K)
    src_masks = output_dict['src_node_corr_knn_masks'].astype(jnp.float32)  # (B, K)
    scores = output_dict['matching_scores'].astype(jnp.float32)             # (B, K+1, K+1)
    transform = data_dict['transform'].astype(jnp.float32)                  # (4, 4)

    B, K, _ = ref_pts.shape
    K1 = K + 1

    # ref packed (B, K1, 4): K on the SUBLANE axis (what the distance broadcast
    # needs), coords in lanes 0..2, validity mask in lane 3; padded slot masked.
    ref_packed = jnp.concatenate(
        [jnp.pad(ref_pts, ((0, 0), (0, 1), (0, 0))),
         jnp.pad(ref_masks, ((0, 0), (0, 1)))[..., None]], axis=-1)

    # src packed (B, 4, K1): K lane-dense, raw coords in sublanes 0..2, mask in
    # sublane 3.  The rigid transform is applied inside the kernel.
    src_packed = jnp.concatenate(
        [jnp.pad(jnp.transpose(src_pts, (0, 2, 1)), ((0, 0), (0, 0), (0, 1))),
         jnp.pad(src_masks, ((0, 0), (0, 1)))[:, None, :]], axis=1)

    tform = transform[:3, :4].reshape(-1)                 # (12,) row-major [R|t]

    out = pl.pallas_call(
        _fine_matching_kernel,
        out_shape=jax.ShapeDtypeStruct((1, 1), jnp.float32),
        in_specs=[
            pl.BlockSpec(memory_space=pltpu.MemorySpace.SMEM),   # transform
            pl.BlockSpec(memory_space=pltpu.MemorySpace.VMEM),   # ref packed
            pl.BlockSpec(memory_space=pltpu.MemorySpace.VMEM),   # src packed
            pl.BlockSpec(memory_space=pltpu.MemorySpace.VMEM),   # matching_scores
        ],
        out_specs=pl.BlockSpec(memory_space=pltpu.MemorySpace.SMEM),
    )(tform, ref_packed, src_packed, scores)
    return out[0, 0]


# -------------------------- pure-JAX reference check ---------------------------
def _reference(output_dict, data_dict):
    rp = output_dict['ref_node_corr_knn_points']
    sp = output_dict['src_node_corr_knn_points']
    rmsk = output_dict['ref_node_corr_knn_masks']
    smsk = output_dict['src_node_corr_knn_masks']
    sc = output_dict['matching_scores']
    tf = data_dict['transform']

    sp = sp @ tf[:3, :3].T + tf[:3, 3]
    # GeoTransformer pairwise_distance (squared, clamped at 0)
    d = jnp.maximum(jnp.sum(rp ** 2, -1)[:, :, None]
                    - 2.0 * jnp.einsum('bkd,bld->bkl', rp, sp)
                    + jnp.sum(sp ** 2, -1)[:, None, :], 0.0)
    gt = (d < POSITIVE_RADIUS ** 2) & (rmsk[:, :, None] & smsk[:, None, :])
    srow = (gt.sum(2) == 0) & rmsk
    scol = (gt.sum(1) == 0) & smsk
    K = rp.shape[1]
    num = (jnp.sum(sc[:, :K, :K] * gt) + jnp.sum(sc[:, :K, K] * srow)
           + jnp.sum(sc[:, K, :K] * scol))
    den = gt.sum() + srow.sum() + scol.sum()
    return -(num / den)


# ----------------------------------- main --------------------------------------
if __name__ == "__main__":
    key = jax.random.PRNGKey(0)
    kp1, kp2, km1, km2, kms = jax.random.split(key, 5)

    B, K = 4, 16   # fine-level patches / knn points per patch

    ref_pts = jax.random.uniform(kp1, (B, K, 3), jnp.float32)
    src_pts = jax.random.uniform(kp2, (B, K, 3), jnp.float32)
    ref_masks = jax.random.uniform(km1, (B, K)) > 0.1
    src_masks = jax.random.uniform(km2, (B, K)) > 0.1
    matching_scores = jax.random.normal(kms, (B, K + 1, K + 1), jnp.float32)

    theta = 0.3
    rot = jnp.array([[jnp.cos(theta), -jnp.sin(theta), 0.0],
                     [jnp.sin(theta), jnp.cos(theta), 0.0],
                     [0.0, 0.0, 1.0]], jnp.float32)
    transform = (jnp.eye(4, dtype=jnp.float32)
                 .at[:3, :3].set(rot)
                 .at[:3, 3].set(jnp.array([0.05, -0.02, 0.03], jnp.float32)))

    output_dict = {
        'ref_node_corr_knn_points': ref_pts,
        'src_node_corr_knn_points': src_pts,
        'ref_node_corr_knn_masks': ref_masks,
        'src_node_corr_knn_masks': src_masks,
        'matching_scores': matching_scores,
    }
    data_dict = {'transform': transform}

    loss = jax.block_until_ready(fine_matching_loss(output_dict, data_dict))
    ref = jax.block_until_ready(_reference(output_dict, data_dict))

    assert jnp.isfinite(loss), f"loss not finite: {loss}"
    assert jnp.allclose(loss, ref, rtol=1e-3, atol=1e-4), \
        f"pallas={loss} ref={ref}"

    print("KERNEL_OK")
</pallas_src>

<mosaic_0001>
module attributes {stable_mosaic.version = 11 : i64} {
  func.func @_fine_matching_kernel(%arg0: memref<12xf32, #tpu.memory_space<smem>>, %arg1: memref<4x17x4xf32, #tpu.memory_space<vmem>>, %arg2: memref<4x4x17xf32, #tpu.memory_space<vmem>>, %arg3: memref<4x17x17xf32, #tpu.memory_space<vmem>>, %arg4: memref<1x1xf32, #tpu.memory_space<smem>>) attributes {dimension_semantics = [], scalar_prefetch = 0 : i64, scratch_operands = 0 : i64, tpu.core_type = #tpu.core_type<tc>} {
    %c0 = arith.constant 0 : index
    %c0_0 = arith.constant 0 : index
    %c0_1 = arith.constant 0 : index
    %0 = vector.load %arg2[%c0, %c0_0, %c0_1] : memref<4x4x17xf32, #tpu.memory_space<vmem>>, vector<4x1x17xf32>
    %c0_2 = arith.constant 0 : index
    %c1 = arith.constant 1 : index
    %c0_3 = arith.constant 0 : index
    %1 = vector.load %arg2[%c0_2, %c1, %c0_3] : memref<4x4x17xf32, #tpu.memory_space<vmem>>, vector<4x1x17xf32>
    %c0_4 = arith.constant 0 : index
    %c2 = arith.constant 2 : index
    %c0_5 = arith.constant 0 : index
    %2 = vector.load %arg2[%c0_4, %c2, %c0_5] : memref<4x4x17xf32, #tpu.memory_space<vmem>>, vector<4x1x17xf32>
    %c0_6 = arith.constant 0 : index
    %c3 = arith.constant 3 : index
    %c0_7 = arith.constant 0 : index
    %3 = vector.load %arg2[%c0_6, %c3, %c0_7] : memref<4x4x17xf32, #tpu.memory_space<vmem>>, vector<4x1x17xf32>
    %c0_8 = arith.constant 0 : index
    %c0_9 = arith.constant 0 : index
    %c3_10 = arith.constant 3 : index
    %4 = vector.load %arg1[%c0_8, %c0_9, %c3_10] : memref<4x17x4xf32, #tpu.memory_space<vmem>>, vector<4x17x1xf32>
    %c0_11 = arith.constant 0 : index
    %5 = memref.load %arg0[%c0_11] : memref<12xf32, #tpu.memory_space<smem>>
    %6 = vector.broadcast %5 : f32 to vector<4x1x17xf32>
    %7 = arith.mulf %6, %0 : vector<4x1x17xf32>
    %c1_12 = arith.constant 1 : index
    %8 = memref.load %arg0[%c1_12] : memref<12xf32, #tpu.memory_space<smem>>
    %9 = vector.broadcast %8 : f32 to vector<4x1x17xf32>
    %10 = arith.mulf %9, %1 : vector<4x1x17xf32>
    %11 = arith.addf %7, %10 : vector<4x1x17xf32>
    %c2_13 = arith.constant 2 : index
    %12 = memref.load %arg0[%c2_13] : memref<12xf32, #tpu.memory_space<smem>>
    %13 = vector.broadcast %12 : f32 to vector<4x1x17xf32>
    %14 = arith.mulf %13, %2 : vector<4x1x17xf32>
    %15 = arith.addf %11, %14 : vector<4x1x17xf32>
    %c3_14 = arith.constant 3 : index
    %16 = memref.load %arg0[%c3_14] : memref<12xf32, #tpu.memory_space<smem>>
    %17 = vector.broadcast %16 : f32 to vector<4x1x17xf32>
    %18 = arith.addf %15, %17 : vector<4x1x17xf32>
    %c0_15 = arith.constant 0 : index
    %c0_16 = arith.constant 0 : index
    %c0_17 = arith.constant 0 : index
    %19 = vector.load %arg1[%c0_15, %c0_16, %c0_17] : memref<4x17x4xf32, #tpu.memory_space<vmem>>, vector<4x17x1xf32>
    %20 = vector.broadcast %19 : vector<4x17x1xf32> to vector<4x17x17xf32>
    %21 = vector.broadcast %18 : vector<4x1x17xf32> to vector<4x17x17xf32>
    %22 = arith.subf %20, %21 : vector<4x17x17xf32>
    %23 = arith.mulf %22, %22 : vector<4x17x17xf32>
    %c4 = arith.constant 4 : index
    %24 = memref.load %arg0[%c4] : memref<12xf32, #tpu.memory_space<smem>>
    %25 = vector.broadcast %24 : f32 to vector<4x1x17xf32>
    %26 = arith.mulf %25, %0 : vector<4x1x17xf32>
    %c5 = arith.constant 5 : index
    %27 = memref.load %arg0[%c5] : memref<12xf32, #tpu.memory_space<smem>>
    %28 = vector.broadcast %27 : f32 to vector<4x1x17xf32>
    %29 = arith.mulf %28, %1 : vector<4x1x17xf32>
    %30 = arith.addf %26, %29 : vector<4x1x17xf32>
    %c6 = arith.constant 6 : index
    %31 = memref.load %arg0[%c6] : memref<12xf32, #tpu.memory_space<smem>>
    %32 = vector.broadcast %31 : f32 to vector<4x1x17xf32>
    %33 = arith.mulf %32, %2 : vector<4x1x17xf32>
    %34 = arith.addf %30, %33 : vector<4x1x17xf32>
    %c7 = arith.constant 7 : index
    %35 = memref.load %arg0[%c7] : memref<12xf32, #tpu.memory_space<smem>>
    %36 = vector.broadcast %35 : f32 to vector<4x1x17xf32>
    %37 = arith.addf %34, %36 : vector<4x1x17xf32>
    %c0_18 = arith.constant 0 : index
    %c0_19 = arith.constant 0 : index
    %c1_20 = arith.constant 1 : index
    %38 = vector.load %arg1[%c0_18, %c0_19, %c1_20] : memref<4x17x4xf32, #tpu.memory_space<vmem>>, vector<4x17x1xf32>
    %39 = vector.broadcast %38 : vector<4x17x1xf32> to vector<4x17x17xf32>
    %40 = vector.broadcast %37 : vector<4x1x17xf32> to vector<4x17x17xf32>
    %41 = arith.subf %39, %40 : vector<4x17x17xf32>
    %42 = arith.mulf %41, %41 : vector<4x17x17xf32>
    %43 = arith.addf %23, %42 : vector<4x17x17xf32>
    %c8 = arith.constant 8 : index
    %44 = memref.load %arg0[%c8] : memref<12xf32, #tpu.memory_space<smem>>
    %45 = vector.broadcast %44 : f32 to vector<4x1x17xf32>
    %46 = arith.mulf %45, %0 : vector<4x1x17xf32>
    %c9 = arith.constant 9 : index
    %47 = memref.load %arg0[%c9] : memref<12xf32, #tpu.memory_space<smem>>
    %48 = vector.broadcast %47 : f32 to vector<4x1x17xf32>
    %49 = arith.mulf %48, %1 : vector<4x1x17xf32>
    %50 = arith.addf %46, %49 : vector<4x1x17xf32>
    %c10 = arith.constant 10 : index
    %51 = memref.load %arg0[%c10] : memref<12xf32, #tpu.memory_space<smem>>
    %52 = vector.broadcast %51 : f32 to vector<4x1x17xf32>
    %53 = arith.mulf %52, %2 : vector<4x1x17xf32>
    %54 = arith.addf %50, %53 : vector<4x1x17xf32>
    %c11 = arith.constant 11 : index
    %55 = memref.load %arg0[%c11] : memref<12xf32, #tpu.memory_space<smem>>
    %56 = vector.broadcast %55 : f32 to vector<4x1x17xf32>
    %57 = arith.addf %54, %56 : vector<4x1x17xf32>
    %c0_21 = arith.constant 0 : index
    %c0_22 = arith.constant 0 : index
    %c2_23 = arith.constant 2 : index
    %58 = vector.load %arg1[%c0_21, %c0_22, %c2_23] : memref<4x17x4xf32, #tpu.memory_space<vmem>>, vector<4x17x1xf32>
    %59 = vector.broadcast %58 : vector<4x17x1xf32> to vector<4x17x17xf32>
    %60 = vector.broadcast %57 : vector<4x1x17xf32> to vector<4x17x17xf32>
    %61 = arith.subf %59, %60 : vector<4x17x17xf32>
    %62 = arith.mulf %61, %61 : vector<4x17x17xf32>
    %63 = arith.addf %43, %62 : vector<4x17x17xf32>
    %cst = arith.constant 0.000000e+00 : f32
    %64 = vector.broadcast %cst : f32 to vector<4x17x1xf32>
    %65 = arith.cmpf ogt, %4, %64 : vector<4x17x1xf32>
    %cst_24 = arith.constant 0.000000e+00 : f32
    %66 = vector.broadcast %cst_24 : f32 to vector<4x1x17xf32>
    %67 = arith.cmpf ogt, %3, %66 : vector<4x1x17xf32>
    %68 = vector.broadcast %65 : vector<4x17x1xi1> to vector<4x17x17xi1>
    %69 = vector.broadcast %67 : vector<4x1x17xi1> to vector<4x17x17xi1>
    %70 = arith.andi %68, %69 : vector<4x17x17xi1>
    %cst_25 = arith.constant 2.500000e-03 : f32
    %71 = vector.broadcast %cst_25 : f32 to vector<4x17x17xf32>
    %72 = arith.cmpf olt, %63, %71 : vector<4x17x17xf32>
    %73 = arith.andi %72, %70 : vector<4x17x17xi1>
    %74 = arith.extui %73 : vector<4x17x17xi1> to vector<4x17x17xi32>
    %75 = arith.sitofp %74 : vector<4x17x17xi32> to vector<4x17x17xf32>
    %cst_26 = arith.constant dense<0.000000e+00> : vector<4x17xf32>
    %76 = vector.multi_reduction <add>, %75, %cst_26 [2] : vector<4x17x17xf32> to vector<4x17xf32>
    %77 = vector.shape_cast %76 : vector<4x17xf32> to vector<4x17x1xf32>
    %cst_27 = arith.constant dense<0.000000e+00> : vector<4x17xf32>
    %78 = vector.multi_reduction <add>, %75, %cst_27 [1] : vector<4x17x17xf32> to vector<4x17xf32>
    %79 = vector.shape_cast %78 : vector<4x17xf32> to vector<4x1x17xf32>
    %cst_28 = arith.constant 0.000000e+00 : f32
    %80 = vector.broadcast %cst_28 : f32 to vector<4x17x1xf32>
    %81 = arith.cmpf oeq, %77, %80 : vector<4x17x1xf32>
    %cst_29 = arith.constant 0.000000e+00 : f32
    %82 = vector.broadcast %cst_29 : f32 to vector<4x17x1xf32>
    %83 = arith.cmpf ogt, %4, %82 : vector<4x17x1xf32>
    %84 = arith.andi %81, %83 : vector<4x17x1xi1>
    %85 = arith.extui %84 : vector<4x17x1xi1> to vector<4x17x1xi32>
    %86 = arith.sitofp %85 : vector<4x17x1xi32> to vector<4x17x1xf32>
    %cst_30 = arith.constant 0.000000e+00 : f32
    %87 = vector.broadcast %cst_30 : f32 to vector<4x1x17xf32>
    %88 = arith.cmpf oeq, %79, %87 : vector<4x1x17xf32>
    %cst_31 = arith.constant 0.000000e+00 : f32
    %89 = vector.broadcast %cst_31 : f32 to vector<4x1x17xf32>
    %90 = arith.cmpf ogt, %3, %89 : vector<4x1x17xf32>
    %91 = arith.andi %88, %90 : vector<4x1x17xi1>
    %92 = arith.extui %91 : vector<4x1x17xi1> to vector<4x1x17xi32>
    %93 = arith.sitofp %92 : vector<4x1x17xi32> to vector<4x1x17xf32>
    %94 = tpu.iota {dimensions = array<i32: 2>} : vector<4x17x17xi32>
    %95 = tpu.iota {dimensions = array<i32: 1>} : vector<4x17x17xi32>
    %c16_i32 = arith.constant 16 : i32
    %96 = vector.broadcast %c16_i32 : i32 to vector<4x17x17xi32>
    %97 = arith.cmpi eq, %94, %96 : vector<4x17x17xi32>
    %98 = arith.extui %97 : vector<4x17x17xi1> to vector<4x17x17xi32>
    %99 = arith.sitofp %98 : vector<4x17x17xi32> to vector<4x17x17xf32>
    %100 = vector.broadcast %86 : vector<4x17x1xf32> to vector<4x17x17xf32>
    %101 = arith.mulf %100, %99 : vector<4x17x17xf32>
    %102 = arith.addf %75, %101 : vector<4x17x17xf32>
    %c16_i32_32 = arith.constant 16 : i32
    %103 = vector.broadcast %c16_i32_32 : i32 to vector<4x17x17xi32>
    %104 = arith.cmpi eq, %95, %103 : vector<4x17x17xi32>
    %105 = arith.extui %104 : vector<4x17x17xi1> to vector<4x17x17xi32>
    %106 = arith.sitofp %105 : vector<4x17x17xi32> to vector<4x17x17xf32>
    %107 = vector.broadcast %93 : vector<4x1x17xf32> to vector<4x17x17xf32>
    %108 = arith.mulf %107, %106 : vector<4x17x17xf32>
    %109 = arith.addf %102, %108 : vector<4x17x17xf32>
    %c0_33 = arith.constant 0 : index
    %c0_34 = arith.constant 0 : index
    %c0_35 = arith.constant 0 : index
    %110 = vector.load %arg3[%c0_33, %c0_34, %c0_35] : memref<4x17x17xf32, #tpu.memory_space<vmem>>, vector<4x17x17xf32>
    %111 = arith.mulf %110, %109 : vector<4x17x17xf32>
    %112 = vector.shape_cast %111 : vector<4x17x17xf32> to vector<1x4x17x17xf32>
    %cst_36 = arith.constant dense<0.000000e+00> : vector<1xf32>
    %113 = vector.multi_reduction <add>, %112, %cst_36 [1, 2, 3] : vector<1x4x17x17xf32> to vector<1xf32>
    %114 = vector.shape_cast %113 : vector<1xf32> to vector<1x1x1x1xf32>
    %115 = vector.extract %114[0, 0, 0, 0] : f32 from vector<1x1x1x1xf32>
    %116 = vector.shape_cast %109 : vector<4x17x17xf32> to vector<1x4x17x17xf32>
    %cst_37 = arith.constant dense<0.000000e+00> : vector<1xf32>
    %117 = vector.multi_reduction <add>, %116, %cst_37 [1, 2, 3] : vector<1x4x17x17xf32> to vector<1xf32>
    %118 = vector.shape_cast %117 : vector<1xf32> to vector<1x1x1x1xf32>
    %119 = vector.extract %118[0, 0, 0, 0] : f32 from vector<1x1x1x1xf32>
    %120 = arith.divf %115, %119 : f32
    %cst_38 = arith.constant 0.000000e+00 : f32
    %121 = arith.subf %cst_38, %120 : f32
    %c0_39 = arith.constant 0 : index
    %c0_40 = arith.constant 0 : index
    %122 = memref.load %arg4[%c0_39, %c0_40] : memref<1x1xf32, #tpu.memory_space<smem>>
    memref.store %121, %arg4[%c0_39, %c0_40] : memref<1x1xf32, #tpu.memory_space<smem>>
    return
  }
}

</mosaic_0001>

<llo_original>
// kernel: tpu_custom_call.1
$region0: #{tpu_custom_call.1}
  #allocation0 [shape = 'u32[]', space=smem, size = 0x4, offset = 0x4, fixed_abs, tag = 'smem constant byte address 0x4 - core index']
  #allocation1 [shape = 'u32[72,128]{1,0:T(1,128)}', space=vmem, size = 0x9000, scoped, tag = 'internal scratch']
  %s0 = inlined_call_operand.vmem [shape: f32[12], index: 0, kind: input, shape index: {}]
  %s1 = inlined_call_operand.vmem [shape: f32[4,17,4], index: 1, kind: input, shape index: {}]
  %s2 = inlined_call_operand.vmem [shape: f32[4,4,17], index: 2, kind: input, shape index: {}]
  %s3 = inlined_call_operand.vmem [shape: f32[4,17,17], index: 3, kind: input, shape index: {}]
  %s4 = inlined_call_operand.hbm [shape: f32[1,1], index: 4, kind: output, shape index: {}]
  %s5 = sld [smem:[#allocation0]]
  $region30: #{tpu_custom_call.1} parent=0
    _
  %s7 = ssub.s32 1, %s5
  %s8 = scalar_select 0, %s7, %s5
  $region1: #{tpu_custom_call.1} parent=0
    #allocation2 [shape = 'u8[512]{0}', space=smem, size = 0x200, scoped, tag = 'input window, operand 0, single buffered']
    #allocation3 [shape = 's32[1]{0}', space=sflag, size = 0x4, scoped, tag = 'scoped memory for tpu_custom_call.1']
    #allocation4 [shape = 's32[1]{0}', space=sflag, size = 0x4, scoped, tag = 'scoped memory for tpu_custom_call.1']
    #allocation5 [shape = 'u8[512]{0}', space=smem, size = 0x200, scoped, tag = 'output window, operand 0, single buffered']
    %9 = vsyncpa [#allocation4], 0
    %10 = vsyncpa [#allocation3], 0
    // Predicated region
    $region2: #{tpu_custom_call.1} parent=1 // pred_check
      _
    $region3: #{tpu_custom_call.1} parent=1 // pred_check_branch
      %12 = sbr.rel (0) target = $region5
    $region4: #{tpu_custom_call.1} parent=1 // pred_region
      %14 = vsyncadd [#allocation4], 0
      %s16 = sshll.u32 %s0, 4
      %s17 = int_to_ptr.vmem [resolvable:$true] %s16
      %19 = dma.vmem_to_smem %s17, 16, [#allocation2], [#allocation4]
    $region5: #{tpu_custom_call.1} parent=1 // pred_fallthru
      _
    // Predicated region
    $region6: #{tpu_custom_call.1} parent=1 // pred_check
      _
    $region7: #{tpu_custom_call.1} parent=1 // pred_check_branch
      %21 = sbr.rel (0) target = $region9
    $region8: #{tpu_custom_call.1} parent=1 // pred_region
      _
    $region9: #{tpu_custom_call.1} parent=1 // pred_fallthru
      _
    // Predicated region
    $region10: #{tpu_custom_call.1} parent=1 // pred_check
      _
    $region11: #{tpu_custom_call.1} parent=1 // pred_check_branch
      %23 = sbr.rel (0) target = $region13
    $region12: #{tpu_custom_call.1} parent=1 // pred_region
      _
    $region13: #{tpu_custom_call.1} parent=1 // pred_fallthru
      _
    // Predicated region
    $region14: #{tpu_custom_call.1} parent=1 // pred_check
      _
    $region15: #{tpu_custom_call.1} parent=1 // pred_check_branch
      %25 = sbr.rel (0) target = $region17
    $region16: #{tpu_custom_call.1} parent=1 // pred_region
      _
    $region17: #{tpu_custom_call.1} parent=1 // pred_fallthru
      _
    // Predicated region
    $region18: #{tpu_custom_call.1} parent=1 // pred_check
      _
    $region19: #{tpu_custom_call.1} parent=1 // pred_check_branch
      %27 = sbr.rel (0) target = $region21
    $region20: #{tpu_custom_call.1} parent=1 // pred_region
      %29 = dma.done [#allocation4], 16
    $region21: #{tpu_custom_call.1} parent=1 // pred_fallthru
      _
    %30 = sfence
    %v31 = vld [vmem:[%s2] sm:$0x1]
    %v32 = vld [vmem:[%s2 + $0x4] sm:$0x1]
    %v33 = vld [vmem:[%s2 + $0x8] sm:$0x1]
    %v34 = vld [vmem:[%s2 + $0xc] sm:$0x1]
    %v35 = vld [vmem:[%s2 + $0x1] sm:$0x1]
    %v36 = vld [vmem:[%s2 + $0x5] sm:$0x1]
    %v37 = vld [vmem:[%s2 + $0x9] sm:$0x1]
    %v38 = vld [vmem:[%s2 + $0xd] sm:$0x1]
    %v39 = vld [vmem:[%s2 + $0x2] sm:$0x1]
    %v40 = vld [vmem:[%s2 + $0x6] sm:$0x1]
    %v41 = vld [vmem:[%s2 + $0xa] sm:$0x1]
    %v42 = vld [vmem:[%s2 + $0xe] sm:$0x1]
    %v43 = vld [vmem:[%s2 + $0x3] sm:$0x1]
    %v44 = vld [vmem:[%s2 + $0x7] sm:$0x1]
    %v45 = vld [vmem:[%s2 + $0xb] sm:$0x1]
    %v46 = vld [vmem:[%s2 + $0xf] sm:$0x1]
    %v47 = vld [vmem:[%s1] sm:$0xff]
    %v48 = vld [vmem:[%s1 + $0x8] sm:$0xff]
    %v49 = vld [vmem:[%s1 + $0x10] sm:$0x1]
    %v50 = vld [vmem:[%s1 + $0x18] sm:$0xff]
    %v51 = vld [vmem:[%s1 + $0x20] sm:$0xff]
    %v52 = vld [vmem:[%s1 + $0x28] sm:$0x1]
    %v53 = vld [vmem:[%s1 + $0x30] sm:$0xff]
    %v54 = vld [vmem:[%s1 + $0x38] sm:$0xff]
    %v55 = vld [vmem:[%s1 + $0x40] sm:$0x1]
    %v56 = vld [vmem:[%s1 + $0x48] sm:$0xff]
    %v57 = vld [vmem:[%s1 + $0x50] sm:$0xff]
    %v58 = vld [vmem:[%s1 + $0x58] sm:$0x1]
    %s59 = sld [smem:[#allocation2]]
    %v60 = vstv %s59
    %v61 = vmul.f32 %v60, %v31
    %v62 = vmul.f32 %v60, %v32
    %v63 = vmul.f32 %v60, %v33
    %v64 = vmul.f32 %v60, %v34
    %s65 = sld [smem:[#allocation2 + $0x1]]
    %v66 = vstv %s65
    %v67 = vmul.f32 %v66, %v35
    %v68 = vmul.f32 %v66, %v36
    %v69 = vmul.f32 %v66, %v37
    %v70 = vmul.f32 %v66, %v38
    %v71 = vadd.f32 %v61, %v67
    %v72 = vadd.f32 %v62, %v68
    %v73 = vadd.f32 %v63, %v69
    %v74 = vadd.f32 %v64, %v70
    %s75 = sld [smem:[#allocation2 + $0x2]]
    %v76 = vstv %s75
    %v77 = vmul.f32 %v76, %v39
    %v78 = vmul.f32 %v76, %v40
    %v79 = vmul.f32 %v76, %v41
    %v80 = vmul.f32 %v76, %v42
    %v81 = vadd.f32 %v71, %v77
    %v82 = vadd.f32 %v72, %v78
    %v83 = vadd.f32 %v73, %v79
    %v84 = vadd.f32 %v74, %v80
    %s85 = sld [smem:[#allocation2 + $0x3]]
    %v86 = vstv %s85
    %v87 = vadd.f32 %v81, %v86
    %v88 = vadd.f32 %v82, %v86
    %v89 = vadd.f32 %v83, %v86
    %v90 = vadd.f32 %v84, %v86
    %92 = vset.pattern.permute.xlu0 0
    %93 = vperm.xlu0 %92, %v47
    %v94 = vpop.permute.xlu0 %93
    %97 = vset.pattern.permute.xlu0 0
    %98 = vperm.xlu0 %97, %v48
    %v99 = vpop.permute.xlu0 %98
    %102 = vset.pattern.permute.xlu0 0
    %103 = vperm.xlu0 %102, %v49
    %v104 = vpop.permute.xlu0 %103
    %107 = vset.pattern.permute.xlu0 0
    %108 = vperm.xlu0 %107, %v50
    %v109 = vpop.permute.xlu0 %108
    %112 = vset.pattern.permute.xlu0 0
    %113 = vperm.xlu0 %112, %v51
    %v114 = vpop.permute.xlu0 %113
    %117 = vset.pattern.permute.xlu0 0
    %118 = vperm.xlu0 %117, %v52
    %v119 = vpop.permute.xlu0 %118
    %122 = vset.pattern.permute.xlu0 0
    %123 = vperm.xlu0 %122, %v53
    %v124 = vpop.permute.xlu0 %123
    %127 = vset.pattern.permute.xlu0 0
    %128 = vperm.xlu0 %127, %v54
    %v129 = vpop.permute.xlu0 %128
    %132 = vset.pattern.permute.xlu0 0
    %133 = vperm.xlu0 %132, %v55
    %v134 = vpop.permute.xlu0 %133
    %137 = vset.pattern.permute.xlu0 0
    %138 = vperm.xlu0 %137, %v56
    %v139 = vpop.permute.xlu0 %138
    %142 = vset.pattern.permute.xlu0 0
    %143 = vperm.xlu0 %142, %v57
    %v144 = vpop.permute.xlu0 %143
    %147 = vset.pattern.permute.xlu0 0
    %148 = vperm.xlu0 %147, %v58
    %v149 = vpop.permute.xlu0 %148
    %v151 = vperm.slane %v87, 0
    %v152 = vperm.slane %v88, 0
    %v153 = vperm.slane %v89, 0
    %v154 = vperm.slane %v90, 0
    %v155 = vsub.f32 %v94, %v151
    %v156 = vsub.f32 %v99, %v151
    %v157 = vsub.f32 %v104, %v151
    %v158 = vsub.f32 %v109, %v152
    %v159 = vsub.f32 %v114, %v152
    %v160 = vsub.f32 %v119, %v152
    %v161 = vsub.f32 %v124, %v153
    %v162 = vsub.f32 %v129, %v153
    %v163 = vsub.f32 %v134, %v153
    %v164 = vsub.f32 %v139, %v154
    %v165 = vsub.f32 %v144, %v154
    %v166 = vsub.f32 %v149, %v154
    %v167 = vmul.f32 %v155, %v155
    %v168 = vmul.f32 %v156, %v156
    %v169 = vmul.f32 %v157, %v157
    %v170 = vmul.f32 %v158, %v158
    %v171 = vmul.f32 %v159, %v159
    %v172 = vmul.f32 %v160, %v160
    %v173 = vmul.f32 %v161, %v161
    %v174 = vmul.f32 %v162, %v162
    %v175 = vmul.f32 %v163, %v163
    %v176 = vmul.f32 %v164, %v164
    %v177 = vmul.f32 %v165, %v165
    %v178 = vmul.f32 %v166, %v166
    %s179 = sld [smem:[#allocation2 + $0x4]]
    %v180 = vstv %s179
    %v181 = vmul.f32 %v180, %v31
    %v182 = vmul.f32 %v180, %v32
    %v183 = vmul.f32 %v180, %v33
    %v184 = vmul.f32 %v180, %v34
    %s185 = sld [smem:[#allocation2 + $0x5]]
    %v186 = vstv %s185
    %v187 = vmul.f32 %v186, %v35
    %v188 = vmul.f32 %v186, %v36
    %v189 = vmul.f32 %v186, %v37
    %v190 = vmul.f32 %v186, %v38
    %v191 = vadd.f32 %v181, %v187
    %v192 = vadd.f32 %v182, %v188
    %v193 = vadd.f32 %v183, %v189
    %v194 = vadd.f32 %v184, %v190
    %s195 = sld [smem:[#allocation2 + $0x6]]
    %v196 = vstv %s195
    %v197 = vmul.f32 %v196, %v39
    %v198 = vmul.f32 %v196, %v40
    %v199 = vmul.f32 %v196, %v41
    %v200 = vmul.f32 %v196, %v42
    %v201 = vadd.f32 %v191, %v197
    %v202 = vadd.f32 %v192, %v198
    %v203 = vadd.f32 %v193, %v199
    %v204 = vadd.f32 %v194, %v200
    %s205 = sld [smem:[#allocation2 + $0x7]]
    %v206 = vstv %s205
    %v207 = vadd.f32 %v201, %v206
    %v208 = vadd.f32 %v202, %v206
    %v209 = vadd.f32 %v203, %v206
    %v210 = vadd.f32 %v204, %v206
    %211 = vset.pattern.permute.xlu0 1
    %212 = vperm.xlu0 %211, %v47
    %v213 = vpop.permute.xlu0 %212
    %215 = vset.pattern.permute.xlu0 1
    %216 = vperm.xlu0 %215, %v48
    %v217 = vpop.permute.xlu0 %216
    %219 = vset.pattern.permute.xlu0 1
    %220 = vperm.xlu0 %219, %v49
    %v221 = vpop.permute.xlu0 %220
    %223 = vset.pattern.permute.xlu0 1
    %224 = vperm.xlu0 %223, %v50
    %v225 = vpop.permute.xlu0 %224
    %227 = vset.pattern.permute.xlu0 1
    %228 = vperm.xlu0 %227, %v51
    %v229 = vpop.permute.xlu0 %228
    %231 = vset.pattern.permute.xlu0 1
    %232 = vperm.xlu0 %231, %v52
    %v233 = vpop.permute.xlu0 %232
    %235 = vset.pattern.permute.xlu0 1
    %236 = vperm.xlu0 %235, %v53
    %v237 = vpop.permute.xlu0 %236
    %239 = vset.pattern.permute.xlu0 1
    %240 = vperm.xlu0 %239, %v54
    %v241 = vpop.permute.xlu0 %240
    %243 = vset.pattern.permute.xlu0 1
    %244 = vperm.xlu0 %243, %v55
    %v245 = vpop.permute.xlu0 %244
    %247 = vset.pattern.permute.xlu0 1
    %248 = vperm.xlu0 %247, %v56
    %v249 = vpop.permute.xlu0 %248
    %251 = vset.pattern.permute.xlu0 1
    %252 = vperm.xlu0 %251, %v57
    %v253 = vpop.permute.xlu0 %252
    %255 = vset.pattern.permute.xlu0 1
    %256 = vperm.xlu0 %255, %v58
    %v257 = vpop.permute.xlu0 %256
    %v259 = vperm.slane %v207, 0
    %v260 = vperm.slane %v208, 0
    %v261 = vperm.slane %v209, 0
    %v262 = vperm.slane %v210, 0
    %v263 = vsub.f32 %v213, %v259
    %v264 = vsub.f32 %v217, %v259
    %v265 = vsub.f32 %v221, %v259
    %v266 = vsub.f32 %v225, %v260
    %v267 = vsub.f32 %v229, %v260
    %v268 = vsub.f32 %v233, %v260
    %v269 = vsub.f32 %v237, %v261
    %v270 = vsub.f32 %v241, %v261
    %v271 = vsub.f32 %v245, %v261
    %v272 = vsub.f32 %v249, %v262
    %v273 = vsub.f32 %v253, %v262
    %v274 = vsub.f32 %v257, %v262
    %v275 = vmul.f32 %v263, %v263
    %v276 = vmul.f32 %v264, %v264
    %v277 = vmul.f32 %v265, %v265
    %v278 = vmul.f32 %v266, %v266
    %v279 = vmul.f32 %v267, %v267
    %v280 = vmul.f32 %v268, %v268
    %v281 = vmul.f32 %v269, %v269
    %v282 = vmul.f32 %v270, %v270
    %v283 = vmul.f32 %v271, %v271
    %v284 = vmul.f32 %v272, %v272
    %v285 = vmul.f32 %v273, %v273
    %v286 = vmul.f32 %v274, %v274
    %v287 = vadd.f32 %v167, %v275
    %v288 = vadd.f32 %v168, %v276
    %v289 = vadd.f32 %v169, %v277
    %v290 = vadd.f32 %v170, %v278
    %v291 = vadd.f32 %v171, %v279
    %v292 = vadd.f32 %v172, %v280
    %v293 = vadd.f32 %v173, %v281
    %v294 = vadd.f32 %v174, %v282
    %v295 = vadd.f32 %v175, %v283
    %v296 = vadd.f32 %v176, %v284
    %v297 = vadd.f32 %v177, %v285
    %v298 = vadd.f32 %v178, %v286
    %s299 = sld [smem:[#allocation2 + $0x8]]
    %v300 = vstv %s299
    %v301 = vmul.f32 %v300, %v31
    %v302 = vmul.f32 %v300, %v32
    %v303 = vmul.f32 %v300, %v33
    %v304 = vmul.f32 %v300, %v34
    %s305 = sld [smem:[#allocation2 + $0x9]]
    %v306 = vstv %s305
    %v307 = vmul.f32 %v306, %v35
    %v308 = vmul.f32 %v306, %v36
    %v309 = vmul.f32 %v306, %v37
    %v310 = vmul.f32 %v306, %v38
    %v311 = vadd.f32 %v301, %v307
    %v312 = vadd.f32 %v302, %v308
    %v313 = vadd.f32 %v303, %v309
    %v314 = vadd.f32 %v304, %v310
    %s315 = sld [smem:[#allocation2 + $0xa]]
    %v316 = vstv %s315
    %v317 = vmul.f32 %v316, %v39
    %v318 = vmul.f32 %v316, %v40
    %v319 = vmul.f32 %v316, %v41
    %v320 = vmul.f32 %v316, %v42
    %v321 = vadd.f32 %v311, %v317
    %v322 = vadd.f32 %v312, %v318
    %v323 = vadd.f32 %v313, %v319
    %v324 = vadd.f32 %v314, %v320
    %s325 = sld [smem:[#allocation2 + $0xb]]
    %v326 = vstv %s325
    %v327 = vadd.f32 %v321, %v326
    %v328 = vadd.f32 %v322, %v326
    %v329 = vadd.f32 %v323, %v326
    %v330 = vadd.f32 %v324, %v326
    %331 = vset.pattern.permute.xlu0 2
    %332 = vperm.xlu0 %331, %v47
    %v333 = vpop.permute.xlu0 %332
    %335 = vset.pattern.permute.xlu0 2
    %336 = vperm.xlu0 %335, %v48
    %v337 = vpop.permute.xlu0 %336
    %339 = vset.pattern.permute.xlu0 2
    %340 = vperm.xlu0 %339, %v49
    %v341 = vpop.permute.xlu0 %340
    %343 = vset.pattern.permute.xlu0 2
    %344 = vperm.xlu0 %343, %v50
    %v345 = vpop.permute.xlu0 %344
    %347 = vset.pattern.permute.xlu0 2
    %348 = vperm.xlu0 %347, %v51
    %v349 = vpop.permute.xlu0 %348
    %351 = vset.pattern.permute.xlu0 2
    %352 = vperm.xlu0 %351, %v52
    %v353 = vpop.permute.xlu0 %352
    %355 = vset.pattern.permute.xlu0 2
    %356 = vperm.xlu0 %355, %v53
    %v357 = vpop.permute.xlu0 %356
    %359 = vset.pattern.permute.xlu0 2
    %360 = vperm.xlu0 %359, %v54
    %v361 = vpop.permute.xlu0 %360
    %363 = vset.pattern.permute.xlu0 2
    %364 = vperm.xlu0 %363, %v55
    %v365 = vpop.permute.xlu0 %364
    %367 = vset.pattern.permute.xlu0 2
    %368 = vperm.xlu0 %367, %v56
    %v369 = vpop.permute.xlu0 %368
    %371 = vset.pattern.permute.xlu0 2
    %372 = vperm.xlu0 %371, %v57
    %v373 = vpop.permute.xlu0 %372
    %375 = vset.pattern.permute.xlu0 2
    %376 = vperm.xlu0 %375, %v58
    %v377 = vpop.permute.xlu0 %376
    %v379 = vperm.slane %v327, 0
    %v380 = vperm.slane %v328, 0
    %v381 = vperm.slane %v329, 0
    %v382 = vperm.slane %v330, 0
    %v383 = vsub.f32 %v333, %v379
    %v384 = vsub.f32 %v337, %v379
    %v385 = vsub.f32 %v341, %v379
    %v386 = vsub.f32 %v345, %v380
    %v387 = vsub.f32 %v349, %v380
    %v388 = vsub.f32 %v353, %v380
    %v389 = vsub.f32 %v357, %v381
    %v390 = vsub.f32 %v361, %v381
    %v391 = vsub.f32 %v365, %v381
    %v392 = vsub.f32 %v369, %v382
    %v393 = vsub.f32 %v373, %v382
    %v394 = vsub.f32 %v377, %v382
    %v395 = vmul.f32 %v383, %v383
    %v396 = vmul.f32 %v384, %v384
    %v397 = vmul.f32 %v385, %v385
    %v398 = vmul.f32 %v386, %v386
    %v399 = vmul.f32 %v387, %v387
    %v400 = vmul.f32 %v388, %v388
    %v401 = vmul.f32 %v389, %v389
    %v402 = vmul.f32 %v390, %v390
    %v403 = vmul.f32 %v391, %v391
    %v404 = vmul.f32 %v392, %v392
    %v405 = vmul.f32 %v393, %v393
    %v406 = vmul.f32 %v394, %v394
    %v407 = vadd.f32 %v287, %v395
    %v408 = vadd.f32 %v288, %v396
    %v409 = vadd.f32 %v289, %v397
    %v410 = vadd.f32 %v290, %v398
    %v411 = vadd.f32 %v291, %v399
    %v412 = vadd.f32 %v292, %v400
    %v413 = vadd.f32 %v293, %v401
    %v414 = vadd.f32 %v294, %v402
    %v415 = vadd.f32 %v295, %v403
    %v416 = vadd.f32 %v296, %v404
    %v417 = vadd.f32 %v297, %v405
    %v418 = vadd.f32 %v298, %v406
    %vm419 = vcmp.gt.f32.partialorder %v47, 0.0
    %vm420 = vcmp.gt.f32.partialorder %v48, 0.0
    %vm421 = vcmp.gt.f32.partialorder %v49, 0.0
    %vm422 = vcmp.gt.f32.partialorder %v50, 0.0
    %vm423 = vcmp.gt.f32.partialorder %v51, 0.0
    %vm424 = vcmp.gt.f32.partialorder %v52, 0.0
    %vm425 = vcmp.gt.f32.partialorder %v53, 0.0
    %vm426 = vcmp.gt.f32.partialorder %v54, 0.0
    %vm427 = vcmp.gt.f32.partialorder %v55, 0.0
    %vm428 = vcmp.gt.f32.partialorder %v56, 0.0
    %vm429 = vcmp.gt.f32.partialorder %v57, 0.0
    %vm430 = vcmp.gt.f32.partialorder %v58, 0.0
    %vm431 = vcmp.gt.f32.partialorder %v43, 0.0
    %vm432 = vcmp.gt.f32.partialorder %v44, 0.0
    %vm433 = vcmp.gt.f32.partialorder %v45, 0.0
    %vm434 = vcmp.gt.f32.partialorder %v46, 0.0
    %v435 = vsel %vm419, 1, 0
    %v436 = vsel %vm420, 1, 0
    %v437 = vsel %vm421, 1, 0
    %v438 = vsel %vm422, 1, 0
    %v439 = vsel %vm423, 1, 0
    %v440 = vsel %vm424, 1, 0
    %v441 = vsel %vm425, 1, 0
    %v442 = vsel %vm426, 1, 0
    %v443 = vsel %vm427, 1, 0
    %v444 = vsel %vm428, 1, 0
    %v445 = vsel %vm429, 1, 0
    %v446 = vsel %vm430, 1, 0
    %447 = vset.pattern.permute.xlu0 3
    %448 = vperm.xlu0 %447, %v435
    %v449 = vpop.permute.xlu0 %448
    %450 = vset.pattern.permute.xlu0 3
    %451 = vperm.xlu0 %450, %v436
    %v452 = vpop.permute.xlu0 %451
    %453 = vset.pattern.permute.xlu0 3
    %454 = vperm.xlu0 %453, %v437
    %v455 = vpop.permute.xlu0 %454
    %456 = vset.pattern.permute.xlu0 3
    %457 = vperm.xlu0 %456, %v438
    %v458 = vpop.permute.xlu0 %457
    %459 = vset.pattern.permute.xlu0 3
    %460 = vperm.xlu0 %459, %v439
    %v461 = vpop.permute.xlu0 %460
    %462 = vset.pattern.permute.xlu0 3
    %463 = vperm.xlu0 %462, %v440
    %v464 = vpop.permute.xlu0 %463
    %465 = vset.pattern.permute.xlu0 3
    %466 = vperm.xlu0 %465, %v441
    %v467 = vpop.permute.xlu0 %466
    %468 = vset.pattern.permute.xlu0 3
    %469 = vperm.xlu0 %468, %v442
    %v470 = vpop.permute.xlu0 %469
    %471 = vset.pattern.permute.xlu0 3
    %472 = vperm.xlu0 %471, %v443
    %v473 = vpop.permute.xlu0 %472
    %474 = vset.pattern.permute.xlu0 3
    %475 = vperm.xlu0 %474, %v444
    %v476 = vpop.permute.xlu0 %475
    %477 = vset.pattern.permute.xlu0 3
    %478 = vperm.xlu0 %477, %v445
    %v479 = vpop.permute.xlu0 %478
    %480 = vset.pattern.permute.xlu0 3
    %481 = vperm.xlu0 %480, %v446
    %v482 = vpop.permute.xlu0 %481
    %vm483 = vcmp.eq.s32.totalorder %v449, 1
    %vm484 = vcmp.eq.s32.totalorder %v452, 1
    %vm485 = vcmp.eq.s32.totalorder %v455, 1
    %vm486 = vcmp.eq.s32.totalorder %v458, 1
    %vm487 = vcmp.eq.s32.totalorder %v461, 1
    %vm488 = vcmp.eq.s32.totalorder %v464, 1
    %vm489 = vcmp.eq.s32.totalorder %v467, 1
    %vm490 = vcmp.eq.s32.totalorder %v470, 1
    %vm491 = vcmp.eq.s32.totalorder %v473, 1
    %vm492 = vcmp.eq.s32.totalorder %v476, 1
    %vm493 = vcmp.eq.s32.totalorder %v479, 1
    %vm494 = vcmp.eq.s32.totalorder %v482, 1
    %v495 = vsel %vm431, 1, 0
    %v496 = vsel %vm432, 1, 0
    %v497 = vsel %vm433, 1, 0
    %v498 = vsel %vm434, 1, 0
    %v499 = vperm.slane %v495, 0
    %v500 = vperm.slane %v496, 0
    %v501 = vperm.slane %v497, 0
    %v502 = vperm.slane %v498, 0
    %vm503 = vcmp.eq.s32.totalorder %v499, 1
    %vm504 = vcmp.eq.s32.totalorder %v500, 1
    %vm505 = vcmp.eq.s32.totalorder %v501, 1
    %vm506 = vcmp.eq.s32.totalorder %v502, 1
    %vm507 = vmand %vm483, %vm503
    %vm508 = vmand %vm484, %vm503
    %vm509 = vmand %vm485, %vm503
    %vm510 = vmand %vm486, %vm504
    %vm511 = vmand %vm487, %vm504
    %vm512 = vmand %vm488, %vm504
    %vm513 = vmand %vm489, %vm505
    %vm514 = vmand %vm490, %vm505
    %vm515 = vmand %vm491, %vm505
    %vm516 = vmand %vm492, %vm506
    %vm517 = vmand %vm493, %vm506
    %vm518 = vmand %vm494, %vm506
    %vm519 = vcmp.lt.f32.partialorder %v407, 0.0025
    %vm520 = vcmp.lt.f32.partialorder %v408, 0.0025
    %vm521 = vcmp.lt.f32.partialorder %v409, 0.0025
    %vm522 = vcmp.lt.f32.partialorder %v410, 0.0025
    %vm523 = vcmp.lt.f32.partialorder %v411, 0.0025
    %vm524 = vcmp.lt.f32.partialorder %v412, 0.0025
    %vm525 = vcmp.lt.f32.partialorder %v413, 0.0025
    %vm526 = vcmp.lt.f32.partialorder %v414, 0.0025
    %vm527 = vcmp.lt.f32.partialorder %v415, 0.0025
    %vm528 = vcmp.lt.f32.partialorder %v416, 0.0025
    %vm529 = vcmp.lt.f32.partialorder %v417, 0.0025
    %vm530 = vcmp.lt.f32.partialorder %v418, 0.0025
    %vm531 = vmand %vm519, %vm507
    %vm532 = vmand %vm520, %vm508
    %vm533 = vmand %vm521, %vm509
    %vm534 = vmand %vm522, %vm510
    %vm535 = vmand %vm523, %vm511
    %vm536 = vmand %vm524, %vm512
    %vm537 = vmand %vm525, %vm513
    %vm538 = vmand %vm526, %vm514
    %vm539 = vmand %vm527, %vm515
    %vm540 = vmand %vm528, %vm516
    %vm541 = vmand %vm529, %vm517
    %vm542 = vmand %vm530, %vm518
    %v543 = vsel %vm531, 1, 0
    %v544 = vsel %vm532, 1, 0
    %v545 = vsel %vm533, 1, 0
    %v546 = vsel %vm534, 1, 0
    %v547 = vsel %vm535, 1, 0
    %v548 = vsel %vm536, 1, 0
    %v549 = vsel %vm537, 1, 0
    %v550 = vsel %vm538, 1, 0
    %v551 = vsel %vm539, 1, 0
    %v552 = vsel %vm540, 1, 0
    %v553 = vsel %vm541, 1, 0
    %v554 = vsel %vm542, 1, 0
    %v555 = vcvt.s32.f32 %v543
    %v556 = vcvt.s32.f32 %v544
    %v557 = vcvt.s32.f32 %v545
    %v558 = vcvt.s32.f32 %v546
    %v559 = vcvt.s32.f32 %v547
    %v560 = vcvt.s32.f32 %v548
    %v561 = vcvt.s32.f32 %v549
    %v562 = vcvt.s32.f32 %v550
    %v563 = vcvt.s32.f32 %v551
    %v564 = vcvt.s32.f32 %v552
    %v565 = vcvt.s32.f32 %v553
    %v566 = vcvt.s32.f32 %v554
    %vm567 = vcmask 138240
    %v568 = vsel %vm567, %v555, 0.0
    %569 = vadd.xlane.f32.xlu0 %v568
    %v570 = vpop.xlane.xlu0 %569
    %v571 = vsel %vm567, %v556, 0.0
    %572 = vadd.xlane.f32.xlu0 %v571
    %v573 = vpop.xlane.xlu0 %572
    %vm574 = vcmask 131072
    %v575 = vsel %vm574, %v557, 0.0
    %576 = vadd.xlane.f32.xlu0 %v575
    %v577 = vpop.xlane.xlu0 %576
    %v578 = vsel %vm567, %v558, 0.0
    %579 = vadd.xlane.f32.xlu0 %v578
    %v580 = vpop.xlane.xlu0 %579
    %v581 = vsel %vm567, %v559, 0.0
    %582 = vadd.xlane.f32.xlu0 %v581
    %v583 = vpop.xlane.xlu0 %582
    %v584 = vsel %vm574, %v560, 0.0
    %585 = vadd.xlane.f32.xlu0 %v584
    %v586 = vpop.xlane.xlu0 %585
    %v587 = vsel %vm567, %v561, 0.0
    %588 = vadd.xlane.f32.xlu0 %v587
    %v589 = vpop.xlane.xlu0 %588
    %v590 = vsel %vm567, %v562, 0.0
    %591 = vadd.xlane.f32.xlu0 %v590
    %v592 = vpop.xlane.xlu0 %591
    %v593 = vsel %vm574, %v563, 0.0
    %594 = vadd.xlane.f32.xlu0 %v593
    %v595 = vpop.xlane.xlu0 %594
    %v596 = vsel %vm567, %v564, 0.0
    %597 = vadd.xlane.f32.xlu0 %v596
    %v598 = vpop.xlane.xlu0 %597
    %v599 = vsel %vm567, %v565, 0.0
    %600 = vadd.xlane.f32.xlu0 %v599
    %v601 = vpop.xlane.xlu0 %600
    %v602 = vsel %vm574, %v566, 0.0
    %603 = vadd.xlane.f32.xlu0 %v602
    %v604 = vpop.xlane.xlu0 %603
    %v605 = vadd.f32 %v568, %v571
    %v606 = vadd.f32 %v605, %v575
    %v607 = vrot.slane %v606, 4
    %v608 = vadd.f32 %v606, %v607
    %v609 = vrot.slane %v608, 2
    %v610 = vadd.f32 %v608, %v609
    %v611 = vrot.slane %v610, 1
    %v612 = vadd.f32 %v610, %v611
    %v613 = vadd.f32 %v578, %v581
    %v614 = vadd.f32 %v613, %v584
    %v615 = vrot.slane %v614, 4
    %v616 = vadd.f32 %v614, %v615
    %v617 = vrot.slane %v616, 2
    %v618 = vadd.f32 %v616, %v617
    %v619 = vrot.slane %v618, 1
    %v620 = vadd.f32 %v618, %v619
    %v621 = vadd.f32 %v587, %v590
    %v622 = vadd.f32 %v621, %v593
    %v623 = vrot.slane %v622, 4
    %v624 = vadd.f32 %v622, %v623
    %v625 = vrot.slane %v624, 2
    %v626 = vadd.f32 %v624, %v625
    %v627 = vrot.slane %v626, 1
    %v628 = vadd.f32 %v626, %v627
    %v629 = vadd.f32 %v596, %v599
    %v630 = vadd.f32 %v629, %v602
    %v631 = vrot.slane %v630, 4
    %v632 = vadd.f32 %v630, %v631
    %v633 = vrot.slane %v632, 2
    %v634 = vadd.f32 %v632, %v633
    %v635 = vrot.slane %v634, 1
    %v636 = vadd.f32 %v634, %v635
    %vm637 = vcmp.eq.f32.partialorder %v570, 0.0
    %vm638 = vcmp.eq.f32.partialorder %v573, 0.0
    %vm639 = vcmp.eq.f32.partialorder %v577, 0.0
    %vm640 = vcmp.eq.f32.partialorder %v580, 0.0
    %vm641 = vcmp.eq.f32.partialorder %v583, 0.0
    %vm642 = vcmp.eq.f32.partialorder %v586, 0.0
    %vm643 = vcmp.eq.f32.partialorder %v589, 0.0
    %vm644 = vcmp.eq.f32.partialorder %v592, 0.0
    %vm645 = vcmp.eq.f32.partialorder %v595, 0.0
    %vm646 = vcmp.eq.f32.partialorder %v598, 0.0
    %vm647 = vcmp.eq.f32.partialorder %v601, 0.0
    %vm648 = vcmp.eq.f32.partialorder %v604, 0.0
    %vm649 = vmand %vm637, %vm419
    %vm650 = vmand %vm638, %vm420
    %vm651 = vmand %vm639, %vm421
    %vm652 = vmand %vm640, %vm422
    %vm653 = vmand %vm641, %vm423
    %vm654 = vmand %vm642, %vm424
    %vm655 = vmand %vm643, %vm425
    %vm656 = vmand %vm644, %vm426
    %vm657 = vmand %vm645, %vm427
    %vm658 = vmand %vm646, %vm428
    %vm659 = vmand %vm647, %vm429
    %vm660 = vmand %vm648, %vm430
    %v661 = vsel %vm649, 1, 0
    %v662 = vsel %vm650, 1, 0
    %v663 = vsel %vm651, 1, 0
    %v664 = vsel %vm652, 1, 0
    %v665 = vsel %vm653, 1, 0
    %v666 = vsel %vm654, 1, 0
    %v667 = vsel %vm655, 1, 0
    %v668 = vsel %vm656, 1, 0
    %v669 = vsel %vm657, 1, 0
    %v670 = vsel %vm658, 1, 0
    %v671 = vsel %vm659, 1, 0
    %v672 = vsel %vm660, 1, 0
    %v673 = vcvt.s32.f32 %v661
    %v674 = vcvt.s32.f32 %v662
    %v675 = vcvt.s32.f32 %v663
    %v676 = vcvt.s32.f32 %v664
    %v677 = vcvt.s32.f32 %v665
    %v678 = vcvt.s32.f32 %v666
    %v679 = vcvt.s32.f32 %v667
    %v680 = vcvt.s32.f32 %v668
    %v681 = vcvt.s32.f32 %v669
    %v682 = vcvt.s32.f32 %v670
    %v683 = vcvt.s32.f32 %v671
    %v684 = vcvt.s32.f32 %v672
    %vm685 = vcmp.eq.f32.partialorder %v612, 0.0
    %vm686 = vcmp.eq.f32.partialorder %v620, 0.0
    %vm687 = vcmp.eq.f32.partialorder %v628, 0.0
    %vm688 = vcmp.eq.f32.partialorder %v636, 0.0
    %vm689 = vmand %vm685, %vm431
    %vm690 = vmand %vm686, %vm432
    %vm691 = vmand %vm687, %vm433
    %vm692 = vmand %vm688, %vm434
    %v693 = vsel %vm689, 1, 0
    %v694 = vsel %vm690, 1, 0
    %v695 = vsel %vm691, 1, 0
    %v696 = vsel %vm692, 1, 0
    %v697 = vcvt.s32.f32 %v693
    %v698 = vcvt.s32.f32 %v694
    %v699 = vcvt.s32.f32 %v695
    %v700 = vcvt.s32.f32 %v696
    %v701 = vlaneseq
    %v702 = vand.u32 %v701, 127
    %v703 = vlaneseq
    %v704 = vshrl.u32 %v703, 7
    %v705 = vadd.s32 %v704, 8
    %v706 = vadd.s32 %v704, 16
    %vm707 = vcmp.eq.s32.totalorder %v702, 16
    %v708 = vsel %vm707, 1, 0
    %v709 = vcvt.s32.f32 %v708
    %711 = vset.pattern.permute.xlu0 3
    %712 = vperm.xlu0 %711, %v673
    %v713 = vpop.permute.xlu0 %712
    %716 = vset.pattern.permute.xlu0 3
    %717 = vperm.xlu0 %716, %v674
    %v718 = vpop.permute.xlu0 %717
    %721 = vset.pattern.permute.xlu0 3
    %722 = vperm.xlu0 %721, %v675
    %v723 = vpop.permute.xlu0 %722
    %726 = vset.pattern.permute.xlu0 3
    %727 = vperm.xlu0 %726, %v676
    %v728 = vpop.permute.xlu0 %727
    %731 = vset.pattern.permute.xlu0 3
    %732 = vperm.xlu0 %731, %v677
    %v733 = vpop.permute.xlu0 %732
    %736 = vset.pattern.permute.xlu0 3
    %737 = vperm.xlu0 %736, %v678
    %v738 = vpop.permute.xlu0 %737
    %741 = vset.pattern.permute.xlu0 3
    %742 = vperm.xlu0 %741, %v679
    %v743 = vpop.permute.xlu0 %742
    %746 = vset.pattern.permute.xlu0 3
    %747 = vperm.xlu0 %746, %v680
    %v748 = vpop.permute.xlu0 %747
    %751 = vset.pattern.permute.xlu0 3
    %752 = vperm.xlu0 %751, %v681
    %v753 = vpop.permute.xlu0 %752
    %756 = vset.pattern.permute.xlu0 3
    %757 = vperm.xlu0 %756, %v682
    %v758 = vpop.permute.xlu0 %757
    %761 = vset.pattern.permute.xlu0 3
    %762 = vperm.xlu0 %761, %v683
    %v763 = vpop.permute.xlu0 %762
    %766 = vset.pattern.permute.xlu0 3
    %767 = vperm.xlu0 %766, %v684
    %v768 = vpop.permute.xlu0 %767
    %v770 = vmul.f32 %v713, %v709
    %v771 = vmul.f32 %v718, %v709
    %v772 = vmul.f32 %v723, %v709
    %v773 = vmul.f32 %v728, %v709
    %v774 = vmul.f32 %v733, %v709
    %v775 = vmul.f32 %v738, %v709
    %v776 = vmul.f32 %v743, %v709
    %v777 = vmul.f32 %v748, %v709
    %v778 = vmul.f32 %v753, %v709
    %v779 = vmul.f32 %v758, %v709
    %v780 = vmul.f32 %v763, %v709
    %v781 = vmul.f32 %v768, %v709
    %v782 = vadd.f32 %v555, %v770
    %v783 = vadd.f32 %v556, %v771
    %v784 = vadd.f32 %v557, %v772
    %v785 = vadd.f32 %v558, %v773
    %v786 = vadd.f32 %v559, %v774
    %v787 = vadd.f32 %v560, %v775
    %v788 = vadd.f32 %v561, %v776
    %v789 = vadd.f32 %v562, %v777
    %v790 = vadd.f32 %v563, %v778
    %v791 = vadd.f32 %v564, %v779
    %v792 = vadd.f32 %v565, %v780
    %v793 = vadd.f32 %v566, %v781
    %vm794 = vcmp.eq.s32.totalorder %v704, 16
    %vm795 = vcmp.eq.s32.totalorder %v705, 16
    %vm796 = vcmp.eq.s32.totalorder %v706, 16
    %v797 = vsel %vm794, 1, 0
    %v798 = vsel %vm795, 1, 0
    %v799 = vsel %vm796, 1, 0
    %v800 = vcvt.s32.f32 %v797
    %v801 = vcvt.s32.f32 %v798
    %v802 = vcvt.s32.f32 %v799
    %v803 = vperm.slane %v697, 0
    %v804 = vperm.slane %v698, 0
    %v805 = vperm.slane %v699, 0
    %v806 = vperm.slane %v700, 0
    %v807 = vmul.f32 %v803, %v800
    %v808 = vmul.f32 %v803, %v801
    %v809 = vmul.f32 %v803, %v802
    %v810 = vmul.f32 %v804, %v800
    %v811 = vmul.f32 %v804, %v801
    %v812 = vmul.f32 %v804, %v802
    %v813 = vmul.f32 %v805, %v800
    %v814 = vmul.f32 %v805, %v801
    %v815 = vmul.f32 %v805, %v802
    %v816 = vmul.f32 %v806, %v800
    %v817 = vmul.f32 %v806, %v801
    %v818 = vmul.f32 %v806, %v802
    %v819 = vadd.f32 %v782, %v807
    %v820 = vadd.f32 %v783, %v808
    %v821 = vadd.f32 %v784, %v809
    %v822 = vadd.f32 %v785, %v810
    %v823 = vadd.f32 %v786, %v811
    %v824 = vadd.f32 %v787, %v812
    %v825 = vadd.f32 %v788, %v813
    %v826 = vadd.f32 %v789, %v814
    %v827 = vadd.f32 %v790, %v815
    %v828 = vadd.f32 %v791, %v816
    %v829 = vadd.f32 %v792, %v817
    %v830 = vadd.f32 %v793, %v818
    %v831 = vld [vmem:[%s3] sm:$0xff]
    %v832 = vld [vmem:[%s3 + $0x8] sm:$0xff]
    %v833 = vld [vmem:[%s3 + $0x10] sm:$0x1]
    %v834 = vld [vmem:[%s3 + $0x18] sm:$0xff]
    %v835 = vld [vmem:[%s3 + $0x20] sm:$0xff]
    %v836 = vld [vmem:[%s3 + $0x28] sm:$0x1]
    %v837 = vld [vmem:[%s3 + $0x30] sm:$0xff]
    %v838 = vld [vmem:[%s3 + $0x38] sm:$0xff]
    %v839 = vld [vmem:[%s3 + $0x40] sm:$0x1]
    %v840 = vld [vmem:[%s3 + $0x48] sm:$0xff]
    %v841 = vld [vmem:[%s3 + $0x50] sm:$0xff]
    %v842 = vld [vmem:[%s3 + $0x58] sm:$0x1]
    %v843 = vmul.f32 %v831, %v819
    %v844 = vmul.f32 %v832, %v820
    %v845 = vmul.f32 %v833, %v821
    %v846 = vmul.f32 %v834, %v822
    %v847 = vmul.f32 %v835, %v823
    %v848 = vmul.f32 %v836, %v824
    %v849 = vmul.f32 %v837, %v825
    %v850 = vmul.f32 %v838, %v826
    %v851 = vmul.f32 %v839, %v827
    %v852 = vmul.f32 %v840, %v828
    %v853 = vmul.f32 %v841, %v829
    %v854 = vmul.f32 %v842, %v830
    %v855 = vsel %vm567, %v843, 0.0
    %v856 = vsel %vm567, %v844, 0.0
    %v857 = vadd.f32 %v855, %v856
    %v858 = vsel %vm574, %v845, 0.0
    %v859 = vadd.f32 %v857, %v858
    %v860 = vsel %vm567, %v846, 0.0
    %v861 = vadd.f32 %v859, %v860
    %v862 = vsel %vm567, %v847, 0.0
    %v863 = vadd.f32 %v861, %v862
    %v864 = vsel %vm574, %v848, 0.0
    %v865 = vadd.f32 %v863, %v864
    %v866 = vsel %vm567, %v849, 0.0
    %v867 = vadd.f32 %v865, %v866
    %v868 = vsel %vm567, %v850, 0.0
    %v869 = vadd.f32 %v867, %v868
    %v870 = vsel %vm574, %v851, 0.0
    %v871 = vadd.f32 %v869, %v870
    %v872 = vsel %vm567, %v852, 0.0
    %v873 = vadd.f32 %v871, %v872
    %v874 = vsel %vm567, %v853, 0.0
    %v875 = vadd.f32 %v873, %v874
    %v876 = vsel %vm574, %v854, 0.0
    %v877 = vadd.f32 %v875, %v876
    %878 = vadd.xlane.f32.xlu0 %v877
    %v879 = vpop.xlane.xlu0 %878
    %v880 = vrot.slane %v879, 4
    %v881 = vadd.f32 %v879, %v880
    %v882 = vrot.slane %v881, 2
    %v883 = vadd.f32 %v881, %v882
    %v884 = vrot.slane %v883, 1
    %v885 = vadd.f32 %v883, %v884
    %s886 = vtos %v885
    %v887 = vsel %vm567, %v819, 0.0
    %v888 = vsel %vm567, %v820, 0.0
    %v889 = vadd.f32 %v887, %v888
    %v890 = vsel %vm574, %v821, 0.0
    %v891 = vadd.f32 %v889, %v890
    %v892 = vsel %vm567, %v822, 0.0
    %v893 = vadd.f32 %v891, %v892
    %v894 = vsel %vm567, %v823, 0.0
    %v895 = vadd.f32 %v893, %v894
    %v896 = vsel %vm574, %v824, 0.0
    %v897 = vadd.f32 %v895, %v896
    %v898 = vsel %vm567, %v825, 0.0
    %v899 = vadd.f32 %v897, %v898
    %v900 = vsel %vm567, %v826, 0.0
    %v901 = vadd.f32 %v899, %v900
    %v902 = vsel %vm574, %v827, 0.0
    %v903 = vadd.f32 %v901, %v902
    %v904 = vsel %vm567, %v828, 0.0
    %v905 = vadd.f32 %v903, %v904
    %v906 = vsel %vm567, %v829, 0.0
    %v907 = vadd.f32 %v905, %v906
    %v908 = vsel %vm574, %v830, 0.0
    %v909 = vadd.f32 %v907, %v908
    %910 = vadd.xlane.f32.xlu0 %v909
    %v911 = vpop.xlane.xlu0 %910
    %v912 = vrot.slane %v911, 4
    %v913 = vadd.f32 %v911, %v912
    %v914 = vrot.slane %v913, 2
    %v915 = vadd.f32 %v913, %v914
    %v916 = vrot.slane %v915, 1
    %v917 = vadd.f32 %v915, %v916
    %s918 = vtos %v917
    %v919 = vstv %s918
    %v920 = vrcp.pop %v919
    %v921 = vmul.f32 %v919, %v920
    %v922 = vsub.f32 1.0, %v921
    %v923 = vmul.f32 %v920, %v922
    %v924 = vadd.f32 %v920, %v923
    %vm925 = vweird.f32 %v919
    %vm926 = vweird.f32 %v920
    %vm927 = vmor %vm925, %vm926
    %v928 = vsel %vm927, %v920, %v924
    %v929 = vand.u32 2147483647, %v919
    %vm930 = vcmp.eq.f32.partialorder %v929, 8.507059e+37
    %v931 = vand.u32 %v919, 2147483648
    %v932 = vor.u32 1.1754944e-38, %v931
    %v933 = vsel %vm930, %v932, %v928
    %s934 = vtos %v933
    %s935 = smul.f32 %s886, %s934
    %s936 = ssub.f32 0.0, %s935
    %s937 = scalar_lea.smem [#allocation5], 0
    %938 = sst [smem:[%s937]] %s936
    // Predicated region
    $region22: #{tpu_custom_call.1} parent=1 // pred_check
      _
    $region23: #{tpu_custom_call.1} parent=1 // pred_check_branch
      %940 = sbr.rel (0) target = $region25
    $region24: #{tpu_custom_call.1} parent=1 // pred_region
      %942 = vsyncadd [#allocation3], 0
      %s944 = sshll.u32 %s4, 4
      %s945 = int_to_ptr.hbm [resolvable:$true] %s944
      %947 = dma.smem_to_hbm [#allocation5], 16, %s945, [#allocation3]
    $region25: #{tpu_custom_call.1} parent=1 // pred_fallthru
      _
    // Predicated region
    $region26: #{tpu_custom_call.1} parent=1 // pred_check
      _
    $region27: #{tpu_custom_call.1} parent=1 // pred_check_branch
      %949 = sbr.rel (0) target = $region29
    $region28: #{tpu_custom_call.1} parent=1 // pred_region
      %951 = dma.done [#allocation3], 16
    $region29: #{tpu_custom_call.1} parent=1 // pred_fallthru
      _
    %952 = sfence
    %953 = vsyncpa [#allocation3], 1
    %954 = vsyncpa [#allocation4], 1

</llo_original>
